<compile_context>
chip_gen: v7x
topology: tpu7x:2x2x1
jax: 0.10.0
libtpu: 0.0.40
codegen_flags: <defaults>
</compile_context>

<pallas_src>
import jax
import jax.numpy as jnp
from jax.experimental import pallas as pl
from jax.experimental.pallas import tpu as pltpu

_LANE = 128
_SUBLANE = 16          # bf16 sublane packing (also a multiple of the f32 sublane, 8)


def _round_up(x, m):
    return (x + m - 1) // m * m


def _cdiv(a, b):
    return -(-a // b)


def _vmem_capacity_bytes():
    # Per-chip VMEM: 128 MiB on v5e/v6e, 64 MiB per TensorCore on v7x.
    try:
        return int(pltpu.get_tpu_info().vmem_capacity_bytes)
    except Exception:
        return 64 << 20            # conservative (v7x) fallback


def _resident_spec(shape, index_map):
    """BlockSpec for blocks whose index never changes: one buffer is enough."""
    try:
        return pl.BlockSpec(shape, index_map, pipeline_mode=pl.Buffered(1))
    except (AttributeError, TypeError):
        return pl.BlockSpec(shape, index_map)   # older jax without pipeline_mode


def gru_cell_kernel(x_ref, h_ref, w_ih_ref, w_hh_ref, b_ih_ref, b_hh_ref,
                    o_ref, gi_ref, gh_ref):
    """Grid = (batch tiles, K tiles). K is the contraction (hidden_in) axis;
    gi/gh are f32 accumulator scratch, gates are evaluated on the last K step."""
    k = pl.program_id(1)
    tk = w_ih_ref.shape[0]
    H = h_ref.shape[1]

    @pl.when(k == 0)
    def _init():
        gi_ref[...] = jnp.zeros_like(gi_ref)
        gh_ref[...] = jnp.zeros_like(gh_ref)

    if tk == H:
        # Common case: weights fully VMEM-resident, single K step.
        x_k = x_ref[...]                                     # bf16
        h_k = h_ref[...]                                     # f32
    else:
        # Streamed weight K-blocks (very large H on v7x's 64 MiB VMEM).
        off = pl.multiple_of(k * tk, _LANE)
        x_k = x_ref[:, pl.ds(off, tk)]
        h_k = h_ref[:, pl.ds(off, tk)]

    # bf16 MXU matmuls, f32 accumulation.
    gi_ref[...] += jnp.dot(x_k, w_ih_ref[...], preferred_element_type=jnp.float32)
    gh_ref[...] += jnp.dot(h_k.astype(jnp.bfloat16), w_hh_ref[...],
                           preferred_element_type=jnp.float32)

    @pl.when(k == pl.num_programs(1) - 1)
    def _finalize():
        gi = gi_ref[...] + b_ih_ref[...]
        gh = gh_ref[...] + b_hh_ref[...]
        # Static, lane-aligned gate slices (PyTorch order: reset, update, new).
        i_r, i_z, i_n = gi[:, 0:H], gi[:, H:2 * H], gi[:, 2 * H:3 * H]
        h_r, h_z, h_n = gh[:, 0:H], gh[:, H:2 * H], gh[:, 2 * H:3 * H]
        # sigmoid(a) = 0.5 * (1 + tanh(a / 2)): one EUP op per gate.
        r = 0.5 * (jnp.tanh(0.5 * (i_r + h_r)) + 1.0)
        z = 0.5 * (jnp.tanh(0.5 * (i_z + h_z)) + 1.0)
        n = jnp.tanh(i_n + r * h_n)
        h = h_ref[...].astype(jnp.float32)                   # full-precision carry
        # h' = (1 - z) * n + z * h  ==  n + z * (h - n)      (one fewer VPU op)
        o_ref[...] = n + z * (h - n)


def prepare_gru_weights(w_ih, w_hh, b_ih, b_hh):
    """One-time weight prep; hoist this out of any decode loop / cache per checkpoint.

    Converts the PyTorch GRUCell layout (3H, H) into the (H, 3H) bf16 layout the
    kernel consumes and reshapes biases to (1, 3H) f32, so the per-step call does
    not re-run a transpose + cast (an extra 2 x 3H x H HBM round trip) every step.
    """
    H3, H = w_ih.shape
    assert w_hh.shape == (H3, H) and b_ih.shape == (H3,) and b_hh.shape == (H3,)
    w_ih_t = jnp.asarray(w_ih, jnp.float32).T.astype(jnp.bfloat16)   # (H, 3H)
    w_hh_t = jnp.asarray(w_hh, jnp.float32).T.astype(jnp.bfloat16)   # (H, 3H)
    b_ih2 = jnp.asarray(b_ih, jnp.float32).reshape(1, H3)
    b_hh2 = jnp.asarray(b_hh, jnp.float32).reshape(1, H3)
    return w_ih_t, w_hh_t, b_ih2, b_hh2


def decoder_rnn_forward(x, hidden, w_ih_t, w_hh_t, b_ih2, b_hh2, *, block_b=None):
    """One GRUCell step (DecoderRNN.forward with a GRU decoder).

    x:       (B, H)  decoder input
    hidden:  (B, H)  previous hidden state
    w_ih_t, w_hh_t, b_ih2, b_hh2: output of prepare_gru_weights()
    returns  (B, H)  f32 new hidden state
    """
    B, H = x.shape
    H3 = 3 * H
    assert hidden.shape == (B, H)
    assert w_ih_t.shape == (H, H3) and w_hh_t.shape == (H, H3)
    assert b_ih2.shape == (1, H3) and b_hh2.shape == (1, H3)
    # Perf note: H a multiple of 128 keeps gate slices / output stores lane-dense.

    x = jnp.asarray(x, jnp.bfloat16)            # MXU operand; halves x DMA
    hidden = jnp.asarray(hidden, jnp.float32)   # kept f32 for the output blend
    w_ih_t = jnp.asarray(w_ih_t, jnp.bfloat16)
    w_hh_t = jnp.asarray(w_hh_t, jnp.bfloat16)
    b_ih2 = jnp.asarray(b_ih2, jnp.float32)
    b_hh2 = jnp.asarray(b_hh2, jnp.float32)

    vmem_cap = _vmem_capacity_bytes()
    budget = int(vmem_cap * 0.45)               # headroom for compiler scratch

    # --- Contraction (K) tiling: resident weights when they fit, streamed
    #     double-buffered K blocks otherwise (large H on v7x). ---
    tk = H
    resident_w_bytes = 2 * (2 * H * H3)         # two bf16 (H, 3H) blocks
    if resident_w_bytes > budget // 2 and H % _LANE == 0:
        while tk > _LANE and H % (tk // 2) == 0 and 2 * (2 * 2 * tk * H3) > budget // 2:
            tk //= 2
    n_k = H // tk if H % tk == 0 else 1
    if H % tk != 0:
        tk, n_k = H, 1
    weights_resident = (n_k == 1)
    w_bytes = 2 * (1 if weights_resident else 2) * (2 * tk * H3) + 2 * 4 * H3

    # --- Batch tiling ---
    # Per-row VMEM: x bf16 (x2 buf) + hidden f32 (x2) + out f32 (x2) + gi/gh f32 scratch.
    per_row = 2 * (2 * H) + 2 * (4 * H) + 2 * (4 * H) + 2 * (4 * H3)
    if block_b is None:
        tb_cap = max(_SUBLANE,
                     min(1024, ((budget - w_bytes) // per_row) // _SUBLANE * _SUBLANE))
        n_tiles = _cdiv(B, tb_cap)
        if n_tiles == 1 and B >= 2 * _SUBLANE:
            n_tiles = 2          # megacore: give both v7x TensorCores a tile
        block_b = _round_up(_cdiv(B, n_tiles), _SUBLANE)
    TB = block_b
    Bp = _round_up(B, TB)
    if Bp != B:
        pad = Bp - B
        x = jnp.pad(x, ((0, pad), (0, 0)))
        hidden = jnp.pad(hidden, ((0, pad), (0, 0)))

    grid = (Bp // TB, n_k)

    needed = w_bytes + TB * per_row
    vmem_limit = int(min(int(vmem_cap * 0.9), max(4 * needed, 32 << 20)))

    cost = pl.CostEstimate(
        flops=int(2 * 2 * Bp * H * H3),
        transcendentals=int(3 * Bp * H),
        bytes_accessed=int(2 * Bp * H + 4 * Bp * H + 4 * Bp * H
                           + 2 * 2 * H * H3 + 2 * 4 * H3),
    )

    batch_spec_x = pl.BlockSpec((TB, H), lambda i, k: (i, 0))
    batch_spec_h = pl.BlockSpec((TB, H), lambda i, k: (i, 0))
    out_spec = pl.BlockSpec((TB, H), lambda i, k: (i, 0))
    if weights_resident:
        w_spec = _resident_spec((tk, H3), lambda i, k: (0, 0))
    else:
        w_spec = pl.BlockSpec((tk, H3), lambda i, k: (k, 0))
    b_spec = _resident_spec((1, H3), lambda i, k: (0, 0))

    out = pl.pallas_call(
        gru_cell_kernel,
        out_shape=jax.ShapeDtypeStruct((Bp, H), jnp.float32),
        grid=grid,
        in_specs=[batch_spec_x, batch_spec_h, w_spec, w_spec, b_spec, b_spec],
        out_specs=out_spec,
        scratch_shapes=[pltpu.VMEM((TB, H3), jnp.float32),
                        pltpu.VMEM((TB, H3), jnp.float32)],
        compiler_params=pltpu.CompilerParams(
            dimension_semantics=("parallel", "arbitrary"),
            vmem_limit_bytes=vmem_limit,
        ),
        cost_estimate=cost,
    )(x, hidden, w_ih_t, w_hh_t, b_ih2, b_hh2)
    return out[:B]


def decoder_rnn_ref(x, hidden, w_ih, w_hh, b_ih, b_hh, matmul_dtype=jnp.float32):
    """Pure-JAX reference mirroring torch.nn.GRUCell (PyTorch weight layouts)."""
    H = hidden.shape[1]
    xm = jnp.asarray(x, matmul_dtype)
    hm = jnp.asarray(hidden, matmul_dtype)
    w_i = jnp.asarray(w_ih, jnp.float32).T.astype(matmul_dtype)
    w_h = jnp.asarray(w_hh, jnp.float32).T.astype(matmul_dtype)
    gi = jnp.dot(xm, w_i, preferred_element_type=jnp.float32) + b_ih
    gh = jnp.dot(hm, w_h, preferred_element_type=jnp.float32) + b_hh
    i_r, i_z, i_n = gi[:, :H], gi[:, H:2 * H], gi[:, 2 * H:]
    h_r, h_z, h_n = gh[:, :H], gh[:, H:2 * H], gh[:, 2 * H:]
    r = jax.nn.sigmoid(i_r + h_r)
    z = jax.nn.sigmoid(i_z + h_z)
    n = jnp.tanh(i_n + r * h_n)
    return (1.0 - z) * n + z * jnp.asarray(hidden, jnp.float32)


if __name__ == "__main__":
    # Small demo: lane-dense hidden (H=128), bf16-sublane-aligned batch.
    B, H = 16, 128

    key = jax.random.PRNGKey(0)
    k_x, k_h, k_wi, k_wh, k_bi, k_bh = jax.random.split(key, 6)

    x = jax.random.normal(k_x, (B, H), dtype=jnp.float32)
    hidden = jax.random.normal(k_h, (B, H), dtype=jnp.float32)

    # Deterministic synthetic GRUCell parameters (PyTorch layouts).
    w_ih = jax.random.normal(k_wi, (3 * H, H), dtype=jnp.float32) * 0.1
    w_hh = jax.random.normal(k_wh, (3 * H, H), dtype=jnp.float32) * 0.1
    b_ih = jax.random.normal(k_bi, (3 * H,), dtype=jnp.float32) * 0.1
    b_hh = jax.random.normal(k_bh, (3 * H,), dtype=jnp.float32) * 0.1

    # One-time weight prep (hoisted out of any decode loop).
    params = prepare_gru_weights(w_ih, w_hh, b_ih, b_hh)

    out = decoder_rnn_forward(x, hidden, *params)
    out = jax.block_until_ready(out)
    assert out.shape == (B, H)

    # Tight check vs a reference using the same bf16 MXU matmuls.
    ref_bf16 = decoder_rnn_ref(x, hidden, w_ih, w_hh, b_ih, b_hh,
                               matmul_dtype=jnp.bfloat16)
    assert jnp.allclose(out, ref_bf16, atol=5e-3, rtol=5e-3), "mismatch vs bf16 reference"

    # Sanity check vs the exact f32 GRUCell reference (bf16-matmul tolerance).
    ref_f32 = decoder_rnn_ref(x, hidden, w_ih, w_hh, b_ih, b_hh)
    assert jnp.allclose(out, ref_f32, atol=5e-2, rtol=5e-2), "mismatch vs f32 reference"

    print("KERNEL_OK")
</pallas_src>

<mosaic_0001>
module attributes {stable_mosaic.version = 11 : i64} {
  func.func @gru_cell_kernel(%arg0: i32, %arg1: i32, %arg2: memref<16x128xbf16, #tpu.memory_space<vmem>>, %arg3: memref<16x128xf32, #tpu.memory_space<vmem>>, %arg4: memref<128x384xbf16, #tpu.memory_space<vmem>>, %arg5: memref<128x384xbf16, #tpu.memory_space<vmem>>, %arg6: memref<1x384xf32, #tpu.memory_space<vmem>>, %arg7: memref<1x384xf32, #tpu.memory_space<vmem>>, %arg8: memref<16x128xf32, #tpu.memory_space<vmem>>, %arg9: memref<16x384xf32, #tpu.memory_space<vmem>>, %arg10: memref<16x384xf32, #tpu.memory_space<vmem>>) attributes {dimension_semantics = [#tpu.dimension_semantics<parallel>, #tpu.dimension_semantics<arbitrary>], iteration_bounds = array<i64: 1, 1>, scalar_prefetch = 0 : i64, scratch_operands = 2 : i64, tpu.core_type = #tpu.core_type<tc>, window_params = [{transform_indices = @transform_0, window_bounds = array<i64: 16, 128>}, {transform_indices = @transform_1, window_bounds = array<i64: 16, 128>}, {pipeline_mode = #tpu.pipeline_mode<synchronous>, transform_indices = @transform_2, window_bounds = array<i64: 128, 384>}, {pipeline_mode = #tpu.pipeline_mode<synchronous>, transform_indices = @transform_3, window_bounds = array<i64: 128, 384>}, {pipeline_mode = #tpu.pipeline_mode<synchronous>, transform_indices = @transform_4, window_bounds = array<i64: 1, 384>}, {pipeline_mode = #tpu.pipeline_mode<synchronous>, transform_indices = @transform_5, window_bounds = array<i64: 1, 384>}, {transform_indices = @transform_6, window_bounds = array<i64: 16, 128>}]} {
    %c0_i32 = arith.constant 0 : i32
    %0 = arith.cmpi eq, %arg1, %c0_i32 : i32
    %1 = arith.extui %0 : i1 to i32
    %c0_i32_0 = arith.constant 0 : i32
    %2 = arith.cmpi ne, %1, %c0_i32_0 : i32
    scf.if %2 {
      %cst_19 = arith.constant 0.000000e+00 : f32
      %19 = vector.broadcast %cst_19 : f32 to vector<16x384xf32>
      %c0_20 = arith.constant 0 : index
      %c0_21 = arith.constant 0 : index
      %20 = vector.load %arg9[%c0_20, %c0_21] : memref<16x384xf32, #tpu.memory_space<vmem>>, vector<16x384xf32>
      tpu.vector_store %arg9[%c0_20, %c0_21], %19 {strides = array<i32>} : memref<16x384xf32, #tpu.memory_space<vmem>>, vector<16x384xf32>,
      %cst_22 = arith.constant 0.000000e+00 : f32
      %21 = vector.broadcast %cst_22 : f32 to vector<16x384xf32>
      %c0_23 = arith.constant 0 : index
      %c0_24 = arith.constant 0 : index
      %22 = vector.load %arg10[%c0_23, %c0_24] : memref<16x384xf32, #tpu.memory_space<vmem>>, vector<16x384xf32>
      tpu.vector_store %arg10[%c0_23, %c0_24], %21 {strides = array<i32>} : memref<16x384xf32, #tpu.memory_space<vmem>>, vector<16x384xf32>,
    } else {
    }
    %c0 = arith.constant 0 : index
    %c0_1 = arith.constant 0 : index
    %3 = vector.load %arg2[%c0, %c0_1] : memref<16x128xbf16, #tpu.memory_space<vmem>>, vector<16x128xbf16>
    %c0_2 = arith.constant 0 : index
    %c0_3 = arith.constant 0 : index
    %4 = vector.load %arg3[%c0_2, %c0_3] : memref<16x128xf32, #tpu.memory_space<vmem>>, vector<16x128xf32>
    %c0_4 = arith.constant 0 : index
    %c0_5 = arith.constant 0 : index
    %5 = vector.load %arg9[%c0_4, %c0_5] : memref<16x384xf32, #tpu.memory_space<vmem>>, vector<16x384xf32>
    %c0_6 = arith.constant 0 : index
    %c0_7 = arith.constant 0 : index
    %6 = vector.load %arg4[%c0_6, %c0_7] : memref<128x384xbf16, #tpu.memory_space<vmem>>, vector<128x384xbf16>
    %cst = arith.constant dense<0.000000e+00> : vector<16x384xf32>
    %7 = tpu.matmul %3, %6, %cst {dimension_numbers = #tpu.dot_dimension_numbers<[1], [0], [0], [1], [0, 0, 1, 1], [], []>} : vector<16x128xbf16>, vector<128x384xbf16>, vector<16x384xf32> -> vector<16x384xf32>
    %8 = arith.addf %5, %7 : vector<16x384xf32>
    %c0_8 = arith.constant 0 : index
    %c0_9 = arith.constant 0 : index
    %9 = vector.load %arg9[%c0_8, %c0_9] : memref<16x384xf32, #tpu.memory_space<vmem>>, vector<16x384xf32>
    tpu.vector_store %arg9[%c0_8, %c0_9], %8 {strides = array<i32>} : memref<16x384xf32, #tpu.memory_space<vmem>>, vector<16x384xf32>,
    %c0_10 = arith.constant 0 : index
    %c0_11 = arith.constant 0 : index
    %10 = vector.load %arg10[%c0_10, %c0_11] : memref<16x384xf32, #tpu.memory_space<vmem>>, vector<16x384xf32>
    %11 = arith.truncf %4 : vector<16x128xf32> to vector<16x128xbf16>
    %c0_12 = arith.constant 0 : index
    %c0_13 = arith.constant 0 : index
    %12 = vector.load %arg5[%c0_12, %c0_13] : memref<128x384xbf16, #tpu.memory_space<vmem>>, vector<128x384xbf16>
    %cst_14 = arith.constant dense<0.000000e+00> : vector<16x384xf32>
    %13 = tpu.matmul %11, %12, %cst_14 {dimension_numbers = #tpu.dot_dimension_numbers<[1], [0], [0], [1], [0, 0, 1, 1], [], []>} : vector<16x128xbf16>, vector<128x384xbf16>, vector<16x384xf32> -> vector<16x384xf32>
    %14 = arith.addf %10, %13 : vector<16x384xf32>
    %c0_15 = arith.constant 0 : index
    %c0_16 = arith.constant 0 : index
    %15 = vector.load %arg10[%c0_15, %c0_16] : memref<16x384xf32, #tpu.memory_space<vmem>>, vector<16x384xf32>
    tpu.vector_store %arg10[%c0_15, %c0_16], %14 {strides = array<i32>} : memref<16x384xf32, #tpu.memory_space<vmem>>, vector<16x384xf32>,
    %c0_i32_17 = arith.constant 0 : i32
    %16 = arith.cmpi eq, %arg1, %c0_i32_17 : i32
    %17 = arith.extui %16 : i1 to i32
    %c0_i32_18 = arith.constant 0 : i32
    %18 = arith.cmpi ne, %17, %c0_i32_18 : i32
    scf.if %18 {
      %c0_19 = arith.constant 0 : index
      %c0_20 = arith.constant 0 : index
      %19 = vector.load %arg9[%c0_19, %c0_20] : memref<16x384xf32, #tpu.memory_space<vmem>>, vector<16x384xf32>
      %c0_21 = arith.constant 0 : index
      %c0_22 = arith.constant 0 : index
      %20 = vector.load %arg6[%c0_21, %c0_22] : memref<1x384xf32, #tpu.memory_space<vmem>>, vector<1x384xf32>
      %21 = vector.broadcast %20 : vector<1x384xf32> to vector<16x384xf32>
      %22 = arith.addf %19, %21 : vector<16x384xf32>
      %c0_23 = arith.constant 0 : index
      %c0_24 = arith.constant 0 : index
      %23 = vector.load %arg10[%c0_23, %c0_24] : memref<16x384xf32, #tpu.memory_space<vmem>>, vector<16x384xf32>
      %c0_25 = arith.constant 0 : index
      %c0_26 = arith.constant 0 : index
      %24 = vector.load %arg7[%c0_25, %c0_26] : memref<1x384xf32, #tpu.memory_space<vmem>>, vector<1x384xf32>
      %25 = vector.broadcast %24 : vector<1x384xf32> to vector<16x384xf32>
      %26 = arith.addf %23, %25 : vector<16x384xf32>
      %27 = vector.extract_strided_slice %22 {offsets = [0, 0], sizes = [16, 128], strides = [1, 1]} : vector<16x384xf32> to vector<16x128xf32>
      %28 = vector.extract_strided_slice %22 {offsets = [0, 128], sizes = [16, 128], strides = [1, 1]} : vector<16x384xf32> to vector<16x128xf32>
      %29 = vector.extract_strided_slice %22 {offsets = [0, 256], sizes = [16, 128], strides = [1, 1]} : vector<16x384xf32> to vector<16x128xf32>
      %30 = vector.extract_strided_slice %26 {offsets = [0, 0], sizes = [16, 128], strides = [1, 1]} : vector<16x384xf32> to vector<16x128xf32>
      %31 = vector.extract_strided_slice %26 {offsets = [0, 128], sizes = [16, 128], strides = [1, 1]} : vector<16x384xf32> to vector<16x128xf32>
      %32 = vector.extract_strided_slice %26 {offsets = [0, 256], sizes = [16, 128], strides = [1, 1]} : vector<16x384xf32> to vector<16x128xf32>
      %33 = arith.addf %27, %30 : vector<16x128xf32>
      %cst_27 = arith.constant 5.000000e-01 : f32
      %34 = vector.broadcast %cst_27 : f32 to vector<16x128xf32>
      %35 = arith.mulf %34, %33 : vector<16x128xf32>
      %36 = math.tanh %35 : vector<16x128xf32>
      %cst_28 = arith.constant 1.000000e+00 : f32
      %37 = vector.broadcast %cst_28 : f32 to vector<16x128xf32>
      %38 = arith.addf %36, %37 : vector<16x128xf32>
      %cst_29 = arith.constant 5.000000e-01 : f32
      %39 = vector.broadcast %cst_29 : f32 to vector<16x128xf32>
      %40 = arith.mulf %39, %38 : vector<16x128xf32>
      %41 = arith.addf %28, %31 : vector<16x128xf32>
      %cst_30 = arith.constant 5.000000e-01 : f32
      %42 = vector.broadcast %cst_30 : f32 to vector<16x128xf32>
      %43 = arith.mulf %42, %41 : vector<16x128xf32>
      %44 = math.tanh %43 : vector<16x128xf32>
      %cst_31 = arith.constant 1.000000e+00 : f32
      %45 = vector.broadcast %cst_31 : f32 to vector<16x128xf32>
      %46 = arith.addf %44, %45 : vector<16x128xf32>
      %cst_32 = arith.constant 5.000000e-01 : f32
      %47 = vector.broadcast %cst_32 : f32 to vector<16x128xf32>
      %48 = arith.mulf %47, %46 : vector<16x128xf32>
      %49 = arith.mulf %40, %32 : vector<16x128xf32>
      %50 = arith.addf %29, %49 : vector<16x128xf32>
      %51 = math.tanh %50 : vector<16x128xf32>
      %c0_33 = arith.constant 0 : index
      %c0_34 = arith.constant 0 : index
      %52 = vector.load %arg3[%c0_33, %c0_34] : memref<16x128xf32, #tpu.memory_space<vmem>>, vector<16x128xf32>
      %53 = arith.subf %52, %51 : vector<16x128xf32>
      %54 = arith.mulf %48, %53 : vector<16x128xf32>
      %55 = arith.addf %51, %54 : vector<16x128xf32>
      %c0_35 = arith.constant 0 : index
      %c0_36 = arith.constant 0 : index
      %56 = vector.load %arg8[%c0_35, %c0_36] : memref<16x128xf32, #tpu.memory_space<vmem>>, vector<16x128xf32>
      tpu.vector_store %arg8[%c0_35, %c0_36], %55 {strides = array<i32>} : memref<16x128xf32, #tpu.memory_space<vmem>>, vector<16x128xf32>,
    } else {
    }
    return
  }
  func.func @transform_0(%arg0: i32, %arg1: i32) -> (i32, i32) {
    %c0_i32 = arith.constant 0 : i32
    %c0_i32_0 = arith.constant 0 : i32
    return %arg0, %c0_i32 : i32, i32
  }
  func.func @transform_1(%arg0: i32, %arg1: i32) -> (i32, i32) {
    %c0_i32 = arith.constant 0 : i32
    %c0_i32_0 = arith.constant 0 : i32
    return %arg0, %c0_i32 : i32, i32
  }
  func.func @transform_2(%arg0: i32, %arg1: i32) -> (i32, i32) {
    %c0_i32 = arith.constant 0 : i32
    %c0_i32_0 = arith.constant 0 : i32
    %c0_i32_1 = arith.constant 0 : i32
    return %c0_i32, %c0_i32_0 : i32, i32
  }
  func.func @transform_3(%arg0: i32, %arg1: i32) -> (i32, i32) {
    %c0_i32 = arith.constant 0 : i32
    %c0_i32_0 = arith.constant 0 : i32
    %c0_i32_1 = arith.constant 0 : i32
    return %c0_i32, %c0_i32_0 : i32, i32
  }
  func.func @transform_4(%arg0: i32, %arg1: i32) -> (i32, i32) {
    %c0_i32 = arith.constant 0 : i32
    %c0_i32_0 = arith.constant 0 : i32
    %c0_i32_1 = arith.constant 0 : i32
    return %c0_i32, %c0_i32_0 : i32, i32
  }
  func.func @transform_5(%arg0: i32, %arg1: i32) -> (i32, i32) {
    %c0_i32 = arith.constant 0 : i32
    %c0_i32_0 = arith.constant 0 : i32
    %c0_i32_1 = arith.constant 0 : i32
    return %c0_i32, %c0_i32_0 : i32, i32
  }
  func.func @transform_6(%arg0: i32, %arg1: i32) -> (i32, i32) {
    %c0_i32 = arith.constant 0 : i32
    %c0_i32_0 = arith.constant 0 : i32
    return %arg0, %c0_i32 : i32, i32
  }
}

</mosaic_0001>

<llo_original>
// kernel: tpu_custom_call.1
$region0: #{tpu_custom_call.1}
  #allocation0 [shape = 'u32[]', space=smem, size = 0x4, offset = 0x4, fixed_abs, tag = 'smem constant byte address 0x4 - core index']
  #allocation1 [shape = 'u32[144,128]{1,0:T(1,128)}', space=vmem, size = 0x12000, scoped, tag = 'internal scratch']
  #allocation2 [shape = 'f32[16,384]{1,0:T(8,128)}', space=vmem, size = 0x6000, scoped, tag = 'scratch operand']
  #allocation3 [shape = 'f32[16,384]{1,0:T(8,128)}', space=vmem, size = 0x6000, scoped, tag = 'scratch operand']
  %s0 = inlined_call_operand.hbm [shape: bf16[16,128], index: 0, kind: input, shape index: {}]
  %s1 = inlined_call_operand.hbm [shape: f32[16,128], index: 1, kind: input, shape index: {}]
  %s2 = inlined_call_operand.hbm [shape: bf16[128,384], index: 2, kind: input, shape index: {}]
  %s3 = inlined_call_operand.hbm [shape: bf16[128,384], index: 3, kind: input, shape index: {}]
  %s4 = inlined_call_operand.vmem [shape: f32[1,384], index: 4, kind: input, shape index: {}]
  %s5 = inlined_call_operand.vmem [shape: f32[1,384], index: 5, kind: input, shape index: {}]
  %s6 = inlined_call_operand.hbm [shape: f32[16,128], index: 6, kind: output, shape index: {}]
  %s7 = sld [smem:[#allocation0]]
  $region58: #{tpu_custom_call.1} parent=0
    _
  %s9 = ssub.s32 1, %s7
  %s10 = scalar_select 0, %s9, %s7
  $region1: #{tpu_custom_call.1} parent=0
    #allocation4 [shape = 'u8[4096]{0}', space=vmem, size = 0x1000, scoped, tag = 'input window, operand 0, single buffered']
    #allocation5 [shape = 's32[1]{0}', space=sflag, size = 0x4, scoped, tag = 'scoped memory for tpu_custom_call.1']
    #allocation6 [shape = 's32[1]{0}', space=sflag, size = 0x4, scoped, tag = 'scoped memory for tpu_custom_call.1']
    #allocation7 [shape = 'u8[8192]{0}', space=vmem, size = 0x2000, scoped, tag = 'input window, operand 1, single buffered']
    #allocation8 [shape = 's32[1]{0}', space=sflag, size = 0x4, scoped, tag = 'scoped memory for tpu_custom_call.1']
    #allocation9 [shape = 'u8[98304]{0}', space=vmem, size = 0x18000, scoped, tag = 'input window, operand 2, single buffered']
    #allocation10 [shape = 'u8[98304]{0}', space=vmem, size = 0x18000, scoped, tag = 'input window, operand 3, single buffered']
    #allocation11 [shape = 's32[1]{0}', space=sflag, size = 0x4, scoped, tag = 'scoped memory for tpu_custom_call.1']
    #allocation12 [shape = 'u8[8192]{0}', space=vmem, size = 0x2000, scoped, tag = 'output window, operand 0, single buffered']
    %11 = vsyncpa [#allocation5], 0
    %12 = vsyncpa [#allocation8], 0
    %13 = vsyncpa [#allocation11], 0
    %14 = vsyncpa [#allocation6], 0
    // Predicated region
    $region2: #{tpu_custom_call.1} parent=1 // pred_check
      _
    $region3: #{tpu_custom_call.1} parent=1 // pred_check_branch
      %16 = sbr.rel (0) target = $region5
    $region4: #{tpu_custom_call.1} parent=1 // pred_region
      %s18 = ssub.s32 128, 128
      %19 = vsyncadd [#allocation5], %s18
      %s20 = sshll.u32 [#allocation4], 4
      %s21 = int_to_ptr.vmem [resolvable:$true] %s20
      %26 = dma.hbm_to_vmem [thread:$0]  %s0, 128, %s21, [#allocation5], 64, 64, 4
    $region5: #{tpu_custom_call.1} parent=1 // pred_fallthru
      _
    // Predicated region
    $region6: #{tpu_custom_call.1} parent=1 // pred_check
      _
    $region7: #{tpu_custom_call.1} parent=1 // pred_check_branch
      %28 = sbr.rel (0) target = $region9
    $region8: #{tpu_custom_call.1} parent=1 // pred_region
      %s30 = ssub.s32 256, 256
      %31 = vsyncadd [#allocation8], %s30
      %s32 = sshll.u32 [#allocation7], 4
      %s33 = int_to_ptr.vmem [resolvable:$true] %s32
      %38 = dma.hbm_to_vmem [thread:$0]  %s1, 256, %s33, [#allocation8], 128, 128, 8
    $region9: #{tpu_custom_call.1} parent=1 // pred_fallthru
      _
    // Predicated region
    $region10: #{tpu_custom_call.1} parent=1 // pred_check
      _
    $region11: #{tpu_custom_call.1} parent=1 // pred_check_branch
      %40 = sbr.rel (0) target = $region13
    $region12: #{tpu_custom_call.1} parent=1 // pred_region
      %s42 = ssub.s32 3072, 3072
      %43 = vsyncadd [#allocation8], %s42
      %s44 = sshll.u32 [#allocation9], 4
      %s45 = int_to_ptr.vmem [resolvable:$true] %s44
      %50 = dma.hbm_to_vmem [thread:$0]  %s2, 3072, %s45, [#allocation8], 192, 192, 12
    $region13: #{tpu_custom_call.1} parent=1 // pred_fallthru
      _
    // Predicated region
    $region14: #{tpu_custom_call.1} parent=1 // pred_check
      _
    $region15: #{tpu_custom_call.1} parent=1 // pred_check_branch
      %52 = sbr.rel (0) target = $region17
    $region16: #{tpu_custom_call.1} parent=1 // pred_region
      %s54 = ssub.s32 3072, 3072
      %55 = vsyncadd [#allocation11], %s54
      %s56 = sshll.u32 [#allocation10], 4
      %s57 = int_to_ptr.vmem [resolvable:$true] %s56
      %62 = dma.hbm_to_vmem [thread:$0]  %s3, 3072, %s57, [#allocation11], 192, 192, 12
    $region17: #{tpu_custom_call.1} parent=1 // pred_fallthru
      _
    // Predicated region
    $region18: #{tpu_custom_call.1} parent=1 // pred_check
      _
    $region19: #{tpu_custom_call.1} parent=1 // pred_check_branch
      %64 = sbr.rel (0) target = $region21
    $region20: #{tpu_custom_call.1} parent=1 // pred_region
      _
    $region21: #{tpu_custom_call.1} parent=1 // pred_fallthru
      _
    // Predicated region
    $region22: #{tpu_custom_call.1} parent=1 // pred_check
      _
    $region23: #{tpu_custom_call.1} parent=1 // pred_check_branch
      %66 = sbr.rel (0) target = $region25
    $region24: #{tpu_custom_call.1} parent=1 // pred_region
      _
    $region25: #{tpu_custom_call.1} parent=1 // pred_fallthru
      _
    // Predicated region
    $region26: #{tpu_custom_call.1} parent=1 // pred_check
      _
    $region27: #{tpu_custom_call.1} parent=1 // pred_check_branch
      %68 = sbr.rel (0) target = $region29
    $region28: #{tpu_custom_call.1} parent=1 // pred_region
      %69 = dma.done [#allocation5], 128
    $region29: #{tpu_custom_call.1} parent=1 // pred_fallthru
      _
    // Predicated region
    $region30: #{tpu_custom_call.1} parent=1 // pred_check
      _
    $region31: #{tpu_custom_call.1} parent=1 // pred_check_branch
      %71 = sbr.rel (0) target = $region33
    $region32: #{tpu_custom_call.1} parent=1 // pred_region
      %72 = dma.done [#allocation8], 256
    $region33: #{tpu_custom_call.1} parent=1 // pred_fallthru
      _
    // Predicated region
    $region34: #{tpu_custom_call.1} parent=1 // pred_check
      _
    $region35: #{tpu_custom_call.1} parent=1 // pred_check_branch
      %74 = sbr.rel (0) target = $region37
    $region36: #{tpu_custom_call.1} parent=1 // pred_region
      %75 = dma.done [#allocation8], 3072
    $region37: #{tpu_custom_call.1} parent=1 // pred_fallthru
      _
    // Predicated region
    $region38: #{tpu_custom_call.1} parent=1 // pred_check
      _
    $region39: #{tpu_custom_call.1} parent=1 // pred_check_branch
      %77 = sbr.rel (0) target = $region41
    $region40: #{tpu_custom_call.1} parent=1 // pred_region
      %78 = dma.done [#allocation11], 3072
    $region41: #{tpu_custom_call.1} parent=1 // pred_fallthru
      _
    %p80 = scmp.eq.s32.totalorder 0, 0
    // Predicated region
    $region42: #{tpu_custom_call.1} parent=1 // pred_check
      %p81 = pneg %p80
    $region43: #{tpu_custom_call.1} parent=1 // pred_check_branch
      %83 = sbr.rel (%p81) target = $region45
    $region44: #{tpu_custom_call.1} parent=1 // pred_region
      %84 = vst [vmem:[#allocation2] sm:$0xff] 0.0
      %85 = vst [vmem:[#allocation2 + $0x8] sm:$0xff] 0.0
      %86 = vst [vmem:[#allocation2 + $0x10] sm:$0xff] 0.0
      %87 = vst [vmem:[#allocation2 + $0x18] sm:$0xff] 0.0
      %88 = vst [vmem:[#allocation2 + $0x20] sm:$0xff] 0.0
      %89 = vst [vmem:[#allocation2 + $0x28] sm:$0xff] 0.0
      %90 = vst [vmem:[#allocation3] sm:$0xff] 0.0
      %91 = vst [vmem:[#allocation3 + $0x8] sm:$0xff] 0.0
      %92 = vst [vmem:[#allocation3 + $0x10] sm:$0xff] 0.0
      %93 = vst [vmem:[#allocation3 + $0x18] sm:$0xff] 0.0
      %94 = vst [vmem:[#allocation3 + $0x20] sm:$0xff] 0.0
      %95 = vst [vmem:[#allocation3 + $0x28] sm:$0xff] 0.0
    $region45: #{tpu_custom_call.1} parent=1 // pred_fallthru
      _
    %v96 = vld [vmem:[#allocation4] sm:$0xf]
    %v97 = vld [vmem:[#allocation4 + $0x4] sm:$0xf]
    %v98 = vld [vmem:[#allocation7] sm:$0xff]
    %v99 = vld [vmem:[#allocation7 + $0x8] sm:$0xff]
    %v100 = vld [vmem:[#allocation2] sm:$0xff]
    %v101 = vld [vmem:[#allocation2 + $0x8] sm:$0xff]
    %v102 = vld [vmem:[#allocation2 + $0x10] sm:$0xff]
    %v103 = vld [vmem:[#allocation2 + $0x18] sm:$0xff]
    %v104 = vld [vmem:[#allocation2 + $0x20] sm:$0xff]
    %v105 = vld [vmem:[#allocation2 + $0x28] sm:$0xff]
    %v106 = vld [vmem:[#allocation9] sm:$0xff]
    %v107 = vld [vmem:[#allocation9 + $0x8] sm:$0xf]
    %v108 = vld [vmem:[#allocation9 + $0xc] sm:$0xff]
    %v109 = vld [vmem:[#allocation9 + $0x14] sm:$0xf]
    %v110 = vld [vmem:[#allocation9 + $0x18] sm:$0xff]
    %v111 = vld [vmem:[#allocation9 + $0x20] sm:$0xf]
    %v112 = vld [vmem:[#allocation9 + $0x24] sm:$0xff]
    %v113 = vld [vmem:[#allocation9 + $0x2c] sm:$0xf]
    %v114 = vld [vmem:[#allocation9 + $0x30] sm:$0xff]
    %v115 = vld [vmem:[#allocation9 + $0x38] sm:$0xf]
    %v116 = vld [vmem:[#allocation9 + $0x3c] sm:$0xff]
    %v117 = vld [vmem:[#allocation9 + $0x44] sm:$0xf]
    %v118 = vld [vmem:[#allocation9 + $0x48] sm:$0xff]
    %v119 = vld [vmem:[#allocation9 + $0x50] sm:$0xf]
    %v120 = vld [vmem:[#allocation9 + $0x54] sm:$0xff]
    %v121 = vld [vmem:[#allocation9 + $0x5c] sm:$0xf]
    %v122 = vld [vmem:[#allocation9 + $0x60] sm:$0xff]
    %v123 = vld [vmem:[#allocation9 + $0x68] sm:$0xf]
    %v124 = vld [vmem:[#allocation9 + $0x6c] sm:$0xff]
    %v125 = vld [vmem:[#allocation9 + $0x74] sm:$0xf]
    %v126 = vld [vmem:[#allocation9 + $0x78] sm:$0xff]
    %v127 = vld [vmem:[#allocation9 + $0x80] sm:$0xf]
    %v128 = vld [vmem:[#allocation9 + $0x84] sm:$0xff]
    %v129 = vld [vmem:[#allocation9 + $0x8c] sm:$0xf]
    %v130 = vld [vmem:[#allocation9 + $0x90] sm:$0xff]
    %v131 = vld [vmem:[#allocation9 + $0x98] sm:$0xf]
    %v132 = vld [vmem:[#allocation9 + $0x9c] sm:$0xff]
    %v133 = vld [vmem:[#allocation9 + $0xa4] sm:$0xf]
    %v134 = vld [vmem:[#allocation9 + $0xa8] sm:$0xff]
    %v135 = vld [vmem:[#allocation9 + $0xb0] sm:$0xf]
    %v136 = vld [vmem:[#allocation9 + $0xb4] sm:$0xff]
    %v137 = vld [vmem:[#allocation9 + $0xbc] sm:$0xf]
    %v140 = vunpack.c.l.b16 %v96
    %v141 = vunpack.c.l.b16 %v97
    %v142 = vpack.c.b16 %v141, %v140
    %v176 = vunpack.c.l.b16 %v106
    %v177 = vunpack.c.h.b16 %v106
    %v178 = vunpack.c.l.b16 %v107
    %v179 = vunpack.c.l.b16 %v108
    %v180 = vunpack.c.h.b16 %v108
    %v181 = vunpack.c.l.b16 %v109
    %v182 = vunpack.c.l.b16 %v110
    %v183 = vunpack.c.h.b16 %v110
    %v184 = vunpack.c.l.b16 %v111
    %v185 = vunpack.c.l.b16 %v112
    %v186 = vunpack.c.h.b16 %v112
    %v187 = vunpack.c.l.b16 %v113
    %v188 = vunpack.c.l.b16 %v114
    %v189 = vunpack.c.h.b16 %v114
    %v190 = vunpack.c.l.b16 %v115
    %v191 = vunpack.c.l.b16 %v116
    %v192 = vunpack.c.h.b16 %v116
    %v193 = vunpack.c.l.b16 %v117
    %v194 = vunpack.c.l.b16 %v118
    %v195 = vunpack.c.h.b16 %v118
    %v196 = vunpack.c.l.b16 %v119
    %v197 = vunpack.c.l.b16 %v120
    %v198 = vunpack.c.h.b16 %v120
    %v199 = vunpack.c.l.b16 %v121
    %v200 = vunpack.c.l.b16 %v122
    %v201 = vunpack.c.h.b16 %v122
    %v202 = vunpack.c.l.b16 %v123
    %v203 = vunpack.c.l.b16 %v124
    %v204 = vunpack.c.h.b16 %v124
    %v205 = vunpack.c.l.b16 %v125
    %v206 = vunpack.c.l.b16 %v126
    %v207 = vunpack.c.h.b16 %v126
    %v208 = vunpack.c.l.b16 %v127
    %v209 = vunpack.c.l.b16 %v128
    %v210 = vunpack.c.h.b16 %v128
    %v211 = vunpack.c.l.b16 %v129
    %v212 = vunpack.c.l.b16 %v130
    %v213 = vunpack.c.h.b16 %v130
    %v214 = vunpack.c.l.b16 %v131
    %v215 = vunpack.c.l.b16 %v132
    %v216 = vunpack.c.h.b16 %v132
    %v217 = vunpack.c.l.b16 %v133
    %v218 = vunpack.c.l.b16 %v134
    %v219 = vunpack.c.h.b16 %v134
    %v220 = vunpack.c.l.b16 %v135
    %v221 = vunpack.c.l.b16 %v136
    %v222 = vunpack.c.h.b16 %v136
    %v223 = vunpack.c.l.b16 %v137
    %v224 = vpack.c.b16 %v179, %v176
    %v225 = vpack.c.b16 %v180, %v177
    %v226 = vpack.c.b16 %v181, %v178
    %v227 = vpack.c.b16 %v185, %v182
    %v228 = vpack.c.b16 %v186, %v183
    %v229 = vpack.c.b16 %v187, %v184
    %v230 = vpack.c.b16 %v191, %v188
    %v231 = vpack.c.b16 %v192, %v189
    %v232 = vpack.c.b16 %v193, %v190
    %v233 = vpack.c.b16 %v197, %v194
    %v234 = vpack.c.b16 %v198, %v195
    %v235 = vpack.c.b16 %v199, %v196
    %v236 = vpack.c.b16 %v203, %v200
    %v237 = vpack.c.b16 %v204, %v201
    %v238 = vpack.c.b16 %v205, %v202
    %v239 = vpack.c.b16 %v209, %v206
    %v240 = vpack.c.b16 %v210, %v207
    %v241 = vpack.c.b16 %v211, %v208
    %v242 = vpack.c.b16 %v215, %v212
    %v243 = vpack.c.b16 %v216, %v213
    %v244 = vpack.c.b16 %v217, %v214
    %v245 = vpack.c.b16 %v221, %v218
    %v246 = vpack.c.b16 %v222, %v219
    %v247 = vpack.c.b16 %v223, %v220
    %272 = vmatprep.subr.bf16.mxu0 %v225
    %273 = vmatpush1.bf16.msra.mxu0 %v224
    %274 = vmatprep.subr.bf16.mxu0 %v228
    %275 = vmatpush1.bf16.msra.mxu0 %v227
    %276 = vmatprep.subr.bf16.mxu0 %v231
    %277 = vmatpush1.bf16.msra.mxu0 %v230
    %278 = vmatprep.subr.bf16.mxu0 %v234
    %279 = vmatpush1.bf16.msra.mxu0 %v233
    %280 = vmatprep.subr.bf16.mxu0 %v237
    %281 = vmatpush1.bf16.msra.mxu0 %v236
    %282 = vmatprep.subr.bf16.mxu0 %v240
    %283 = vmatpush1.bf16.msra.mxu0 %v239
    %284 = vmatprep.subr.bf16.mxu0 %v243
    %285 = vmatpush1.bf16.msra.mxu0 %v242
    %286 = vmatprep.subr.bf16.mxu0 %v246
    %287 = vmatpush1.bf16.msra.mxu0 %v245
    %288 = vmatprep.subr.bf16.mxu0 0
    %289 = vmatpush1.bf16.msra.mxu0 0
    %290 = vmatprep.subr.bf16.mxu0 0
    %291 = vmatpush1.bf16.msra.mxu0 0
    %292 = vmatprep.subr.bf16.mxu0 0
    %293 = vmatpush1.bf16.msra.mxu0 0
    %294 = vmatprep.subr.bf16.mxu0 0
    %295 = vmatpush1.bf16.msra.mxu0 0
    %296 = vmatprep.subr.bf16.mxu0 0
    %297 = vmatpush1.bf16.msra.mxu0 0
    %298 = vmatprep.subr.bf16.mxu0 0
    %299 = vmatpush1.bf16.msra.mxu0 0
    %300 = vmatprep.subr.bf16.mxu0 0
    %301 = vmatpush1.bf16.msra.mxu0 0
    %302 = vmatprep.subr.bf16.mxu0 0
    %303 = vmatpush1.bf16.msra.mxu0 0
    %304 = vmatprep.mubr.bf16.mxu0 0
    %305 = vmatmul.mubr.bf16.gmra.mrb[0].mxu0 %v142
    %v306 = vpop.f32.mrb[0].mxu0
    %v307 = vadd.f32 0.0, %v306
    %v308 = vpop.f32.mrb[0].mxu0
    %v309 = vadd.f32 0.0, %v308
    %v310 = vpop.f32.mrb[0].mxu0
    %v311 = vadd.f32 0.0, %v310
    %v312 = vpop.f32.mrb[0].mxu0
    %v313 = vadd.f32 0.0, %v312
    %314 = vdwg.mxu0
    %315 = vmatprep.subr.bf16.mxu0 0
    %316 = vmatpush1.bf16.msra.mxu0 %v226
    %317 = vmatprep.subr.bf16.mxu0 0
    %318 = vmatpush1.bf16.msra.mxu0 %v229
    %319 = vmatprep.subr.bf16.mxu0 0
    %320 = vmatpush1.bf16.msra.mxu0 %v232
    %321 = vmatprep.subr.bf16.mxu0 0
    %322 = vmatpush1.bf16.msra.mxu0 %v235
    %323 = vmatprep.subr.bf16.mxu0 0
    %324 = vmatpush1.bf16.msra.mxu0 %v238
    %325 = vmatprep.subr.bf16.mxu0 0
    %326 = vmatpush1.bf16.msra.mxu0 %v241
    %327 = vmatprep.subr.bf16.mxu0 0
    %328 = vmatpush1.bf16.msra.mxu0 %v244
    %329 = vmatprep.subr.bf16.mxu0 0
    %330 = vmatpush1.bf16.msra.mxu0 %v247
    %331 = vmatprep.subr.bf16.mxu0 0
    %332 = vmatpush1.bf16.msra.mxu0 0
    %333 = vmatprep.subr.bf16.mxu0 0
    %334 = vmatpush1.bf16.msra.mxu0 0
    %335 = vmatprep.subr.bf16.mxu0 0
    %336 = vmatpush1.bf16.msra.mxu0 0
    %337 = vmatprep.subr.bf16.mxu0 0
    %338 = vmatpush1.bf16.msra.mxu0 0
    %339 = vmatprep.subr.bf16.mxu0 0
    %340 = vmatpush1.bf16.msra.mxu0 0
    %341 = vmatprep.subr.bf16.mxu0 0
    %342 = vmatpush1.bf16.msra.mxu0 0
    %343 = vmatprep.subr.bf16.mxu0 0
    %344 = vmatpush1.bf16.msra.mxu0 0
    %345 = vmatprep.subr.bf16.mxu0 0
    %346 = vmatpush1.bf16.msra.mxu0 0
    %347 = vmatprep.mubr.bf16.mxu0 0
    %348 = vmatmul.mubr.bf16.gmra.mrb[0].mxu0 %v142
    %v349 = vpop.f32.mrb[0].mxu0
    %v350 = vadd.f32 0.0, %v349
    %v351 = vpop.f32.mrb[0].mxu0
    %v352 = vpop.f32.mrb[0].mxu0
    %v353 = vadd.f32 0.0, %v352
    %v354 = vpop.f32.mrb[0].mxu0
    %355 = vdwg.mxu0
    %v356 = vadd.f32 %v100, %v307
    %v357 = vadd.f32 %v101, %v309
    %v358 = vadd.f32 %v102, %v350
    %v359 = vadd.f32 %v103, %v311
    %v360 = vadd.f32 %v104, %v313
    %v361 = vadd.f32 %v105, %v353
    %362 = vst [vmem:[#allocation2] sm:$0xff] %v356
    %363 = vst [vmem:[#allocation2 + $0x8] sm:$0xff] %v357
    %364 = vst [vmem:[#allocation2 + $0x10] sm:$0xff] %v358
    %365 = vst [vmem:[#allocation2 + $0x18] sm:$0xff] %v359
    %366 = vst [vmem:[#allocation2 + $0x20] sm:$0xff] %v360
    %367 = vst [vmem:[#allocation2 + $0x28] sm:$0xff] %v361
    %v368 = vld [vmem:[#allocation3] sm:$0xff]
    %v369 = vld [vmem:[#allocation3 + $0x8] sm:$0xff]
    %v370 = vld [vmem:[#allocation3 + $0x10] sm:$0xff]
    %v371 = vld [vmem:[#allocation3 + $0x18] sm:$0xff]
    %v372 = vld [vmem:[#allocation3 + $0x20] sm:$0xff]
    %v373 = vld [vmem:[#allocation3 + $0x28] sm:$0xff]
    %v374 = vpack.c.bf16 %v99, %v98
    %v375 = vld [vmem:[#allocation10] sm:$0xff]
    %v376 = vld [vmem:[#allocation10 + $0x8] sm:$0xf]
    %v377 = vld [vmem:[#allocation10 + $0xc] sm:$0xff]
    %v378 = vld [vmem:[#allocation10 + $0x14] sm:$0xf]
    %v379 = vld [vmem:[#allocation10 + $0x18] sm:$0xff]
    %v380 = vld [vmem:[#allocation10 + $0x20] sm:$0xf]
    %v381 = vld [vmem:[#allocation10 + $0x24] sm:$0xff]
    %v382 = vld [vmem:[#allocation10 + $0x2c] sm:$0xf]
    %v383 = vld [vmem:[#allocation10 + $0x30] sm:$0xff]
    %v384 = vld [vmem:[#allocation10 + $0x38] sm:$0xf]
    %v385 = vld [vmem:[#allocation10 + $0x3c] sm:$0xff]
    %v386 = vld [vmem:[#allocation10 + $0x44] sm:$0xf]
    %v387 = vld [vmem:[#allocation10 + $0x48] sm:$0xff]
    %v388 = vld [vmem:[#allocation10 + $0x50] sm:$0xf]
    %v389 = vld [vmem:[#allocation10 + $0x54] sm:$0xff]
    %v390 = vld [vmem:[#allocation10 + $0x5c] sm:$0xf]
    %v391 = vld [vmem:[#allocation10 + $0x60] sm:$0xff]
    %v392 = vld [vmem:[#allocation10 + $0x68] sm:$0xf]
    %v393 = vld [vmem:[#allocation10 + $0x6c] sm:$0xff]
    %v394 = vld [vmem:[#allocation10 + $0x74] sm:$0xf]
    %v395 = vld [vmem:[#allocation10 + $0x78] sm:$0xff]
    %v396 = vld [vmem:[#allocation10 + $0x80] sm:$0xf]
    %v397 = vld [vmem:[#allocation10 + $0x84] sm:$0xff]
    %v398 = vld [vmem:[#allocation10 + $0x8c] sm:$0xf]
    %v399 = vld [vmem:[#allocation10 + $0x90] sm:$0xff]
    %v400 = vld [vmem:[#allocation10 + $0x98] sm:$0xf]
    %v401 = vld [vmem:[#allocation10 + $0x9c] sm:$0xff]
    %v402 = vld [vmem:[#allocation10 + $0xa4] sm:$0xf]
    %v403 = vld [vmem:[#allocation10 + $0xa8] sm:$0xff]
    %v404 = vld [vmem:[#allocation10 + $0xb0] sm:$0xf]
    %v405 = vld [vmem:[#allocation10 + $0xb4] sm:$0xff]
    %v406 = vld [vmem:[#allocation10 + $0xbc] sm:$0xf]
    %v439 = vunpack.c.l.b16 %v375
    %v440 = vunpack.c.h.b16 %v375
    %v441 = vunpack.c.l.b16 %v376
    %v442 = vunpack.c.l.b16 %v377
    %v443 = vunpack.c.h.b16 %v377
    %v444 = vunpack.c.l.b16 %v378
    %v445 = vunpack.c.l.b16 %v379
    %v446 = vunpack.c.h.b16 %v379
    %v447 = vunpack.c.l.b16 %v380
    %v448 = vunpack.c.l.b16 %v381
    %v449 = vunpack.c.h.b16 %v381
    %v450 = vunpack.c.l.b16 %v382
    %v451 = vunpack.c.l.b16 %v383
    %v452 = vunpack.c.h.b16 %v383
    %v453 = vunpack.c.l.b16 %v384
    %v454 = vunpack.c.l.b16 %v385
    %v455 = vunpack.c.h.b16 %v385
    %v456 = vunpack.c.l.b16 %v386
    %v457 = vunpack.c.l.b16 %v387
    %v458 = vunpack.c.h.b16 %v387
    %v459 = vunpack.c.l.b16 %v388
    %v460 = vunpack.c.l.b16 %v389
    %v461 = vunpack.c.h.b16 %v389
    %v462 = vunpack.c.l.b16 %v390
    %v463 = vunpack.c.l.b16 %v391
    %v464 = vunpack.c.h.b16 %v391
    %v465 = vunpack.c.l.b16 %v392
    %v466 = vunpack.c.l.b16 %v393
    %v467 = vunpack.c.h.b16 %v393
    %v468 = vunpack.c.l.b16 %v394
    %v469 = vunpack.c.l.b16 %v395
    %v470 = vunpack.c.h.b16 %v395
    %v471 = vunpack.c.l.b16 %v396
    %v472 = vunpack.c.l.b16 %v397
    %v473 = vunpack.c.h.b16 %v397
    %v474 = vunpack.c.l.b16 %v398
    %v475 = vunpack.c.l.b16 %v399
    %v476 = vunpack.c.h.b16 %v399
    %v477 = vunpack.c.l.b16 %v400
    %v478 = vunpack.c.l.b16 %v401
    %v479 = vunpack.c.h.b16 %v401
    %v480 = vunpack.c.l.b16 %v402
    %v481 = vunpack.c.l.b16 %v403
    %v482 = vunpack.c.h.b16 %v403
    %v483 = vunpack.c.l.b16 %v404
    %v484 = vunpack.c.l.b16 %v405
    %v485 = vunpack.c.h.b16 %v405
    %v486 = vunpack.c.l.b16 %v406
    %v487 = vpack.c.b16 %v442, %v439
    %v488 = vpack.c.b16 %v443, %v440
    %v489 = vpack.c.b16 %v444, %v441
    %v490 = vpack.c.b16 %v448, %v445
    %v491 = vpack.c.b16 %v449, %v446
    %v492 = vpack.c.b16 %v450, %v447
    %v493 = vpack.c.b16 %v454, %v451
    %v494 = vpack.c.b16 %v455, %v452
    %v495 = vpack.c.b16 %v456, %v453
    %v496 = vpack.c.b16 %v460, %v457
    %v497 = vpack.c.b16 %v461, %v458
    %v498 = vpack.c.b16 %v462, %v459
    %v499 = vpack.c.b16 %v466, %v463
    %v500 = vpack.c.b16 %v467, %v464
    %v501 = vpack.c.b16 %v468, %v465
    %v502 = vpack.c.b16 %v472, %v469
    %v503 = vpack.c.b16 %v473, %v470
    %v504 = vpack.c.b16 %v474, %v471
    %v505 = vpack.c.b16 %v478, %v475
    %v506 = vpack.c.b16 %v479, %v476
    %v507 = vpack.c.b16 %v480, %v477
    %v508 = vpack.c.b16 %v484, %v481
    %v509 = vpack.c.b16 %v485, %v482
    %v510 = vpack.c.b16 %v486, %v483
    %535 = vmatprep.subr.bf16.mxu0 %v488
    %536 = vmatpush1.bf16.msra.mxu0 %v487
    %537 = vmatprep.subr.bf16.mxu0 %v491
    %538 = vmatpush1.bf16.msra.mxu0 %v490
    %539 = vmatprep.subr.bf16.mxu0 %v494
    %540 = vmatpush1.bf16.msra.mxu0 %v493
    %541 = vmatprep.subr.bf16.mxu0 %v497
    %542 = vmatpush1.bf16.msra.mxu0 %v496
    %543 = vmatprep.subr.bf16.mxu0 %v500
    %544 = vmatpush1.bf16.msra.mxu0 %v499
    %545 = vmatprep.subr.bf16.mxu0 %v503
    %546 = vmatpush1.bf16.msra.mxu0 %v502
    %547 = vmatprep.subr.bf16.mxu0 %v506
    %548 = vmatpush1.bf16.msra.mxu0 %v505
    %549 = vmatprep.subr.bf16.mxu0 %v509
    %550 = vmatpush1.bf16.msra.mxu0 %v508
    %551 = vmatprep.subr.bf16.mxu0 0
    %552 = vmatpush1.bf16.msra.mxu0 0
    %553 = vmatprep.subr.bf16.mxu0 0
    %554 = vmatpush1.bf16.msra.mxu0 0
    %555 = vmatprep.subr.bf16.mxu0 0
    %556 = vmatpush1.bf16.msra.mxu0 0
    %557 = vmatprep.subr.bf16.mxu0 0
    %558 = vmatpush1.bf16.msra.mxu0 0
    %559 = vmatprep.subr.bf16.mxu0 0
    %560 = vmatpush1.bf16.msra.mxu0 0
    %561 = vmatprep.subr.bf16.mxu0 0
    %562 = vmatpush1.bf16.msra.mxu0 0
    %563 = vmatprep.subr.bf16.mxu0 0
    %564 = vmatpush1.bf16.msra.mxu0 0
    %565 = vmatprep.subr.bf16.mxu0 0
    %566 = vmatpush1.bf16.msra.mxu0 0
    %567 = vmatprep.mubr.bf16.mxu0 0
    %568 = vmatmul.mubr.bf16.gmra.mrb[0].mxu0 %v374
    %v569 = vpop.f32.mrb[0].mxu0
    %v570 = vadd.f32 0.0, %v569
    %v571 = vpop.f32.mrb[0].mxu0
    %v572 = vadd.f32 0.0, %v571
    %v573 = vpop.f32.mrb[0].mxu0
    %v574 = vadd.f32 0.0, %v573
    %v575 = vpop.f32.mrb[0].mxu0
    %v576 = vadd.f32 0.0, %v575
    %577 = vdwg.mxu0
    %578 = vmatprep.subr.bf16.mxu0 0
    %579 = vmatpush1.bf16.msra.mxu0 %v489
    %580 = vmatprep.subr.bf16.mxu0 0
    %581 = vmatpush1.bf16.msra.mxu0 %v492
    %582 = vmatprep.subr.bf16.mxu0 0
    %583 = vmatpush1.bf16.msra.mxu0 %v495
    %584 = vmatprep.subr.bf16.mxu0 0
    %585 = vmatpush1.bf16.msra.mxu0 %v498
    %586 = vmatprep.subr.bf16.mxu0 0
    %587 = vmatpush1.bf16.msra.mxu0 %v501
    %588 = vmatprep.subr.bf16.mxu0 0
    %589 = vmatpush1.bf16.msra.mxu0 %v504
    %590 = vmatprep.subr.bf16.mxu0 0
    %591 = vmatpush1.bf16.msra.mxu0 %v507
    %592 = vmatprep.subr.bf16.mxu0 0
    %593 = vmatpush1.bf16.msra.mxu0 %v510
    %594 = vmatprep.subr.bf16.mxu0 0
    %595 = vmatpush1.bf16.msra.mxu0 0
    %596 = vmatprep.subr.bf16.mxu0 0
    %597 = vmatpush1.bf16.msra.mxu0 0
    %598 = vmatprep.subr.bf16.mxu0 0
    %599 = vmatpush1.bf16.msra.mxu0 0
    %600 = vmatprep.subr.bf16.mxu0 0
    %601 = vmatpush1.bf16.msra.mxu0 0
    %602 = vmatprep.subr.bf16.mxu0 0
    %603 = vmatpush1.bf16.msra.mxu0 0
    %604 = vmatprep.subr.bf16.mxu0 0
    %605 = vmatpush1.bf16.msra.mxu0 0
    %606 = vmatprep.subr.bf16.mxu0 0
    %607 = vmatpush1.bf16.msra.mxu0 0
    %608 = vmatprep.subr.bf16.mxu0 0
    %609 = vmatpush1.bf16.msra.mxu0 0
    %610 = vmatprep.mubr.bf16.mxu0 0
    %611 = vmatmul.mubr.bf16.gmra.mrb[0].mxu0 %v374
    %v612 = vpop.f32.mrb[0].mxu0
    %v613 = vadd.f32 0.0, %v612
    %v614 = vpop.f32.mrb[0].mxu0
    %v615 = vpop.f32.mrb[0].mxu0
    %v616 = vadd.f32 0.0, %v615
    %v617 = vpop.f32.mrb[0].mxu0
    %618 = vdwg.mxu0
    %v619 = vadd.f32 %v368, %v570
    %v620 = vadd.f32 %v369, %v572
    %v621 = vadd.f32 %v370, %v613
    %v622 = vadd.f32 %v371, %v574
    %v623 = vadd.f32 %v372, %v576
    %v624 = vadd.f32 %v373, %v616
    %625 = vst [vmem:[#allocation3] sm:$0xff] %v619
    %626 = vst [vmem:[#allocation3 + $0x8] sm:$0xff] %v620
    %627 = vst [vmem:[#allocation3 + $0x10] sm:$0xff] %v621
    %628 = vst [vmem:[#allocation3 + $0x18] sm:$0xff] %v622
    %629 = vst [vmem:[#allocation3 + $0x20] sm:$0xff] %v623
    %630 = vst [vmem:[#allocation3 + $0x28] sm:$0xff] %v624
    // Predicated region
    $region46: #{tpu_custom_call.1} parent=1 // pred_check
      %p631 = pneg %p80
    $region47: #{tpu_custom_call.1} parent=1 // pred_check_branch
      %633 = sbr.rel (%p631) target = $region49
    $region48: #{tpu_custom_call.1} parent=1 // pred_region
      %v634 = vld [vmem:[#allocation2] sm:$0xff]
      %v635 = vld [vmem:[#allocation2 + $0x8] sm:$0xff]
      %v636 = vld [vmem:[#allocation2 + $0x10] sm:$0xff]
      %v637 = vld [vmem:[#allocation2 + $0x18] sm:$0xff]
      %v638 = vld [vmem:[#allocation2 + $0x20] sm:$0xff]
      %v639 = vld [vmem:[#allocation2 + $0x28] sm:$0xff]
      %v640 = vld [vmem:[%s4] sm:$0x7]
      %v642 = vlaneseq
      %v643 = vshrl.u32 %v642, 7
      %v644 = vsub.s32 0, %v643
      %v645 = vrot.slane %v640, %v644
      %v646 = vlaneseq
      %v647 = vshrl.u32 %v646, 7
      %v648 = vsub.s32 1, %v647
      %v649 = vrot.slane %v640, %v648
      %v650 = vlaneseq
      %v651 = vshrl.u32 %v650, 7
      %v652 = vsub.s32 2, %v651
      %v653 = vrot.slane %v640, %v652
      %v657 = vadd.f32 %v634, %v645
      %v658 = vadd.f32 %v635, %v649
      %v659 = vadd.f32 %v636, %v653
      %v660 = vadd.f32 %v637, %v645
      %v661 = vadd.f32 %v638, %v649
      %v662 = vadd.f32 %v639, %v653
      %v663 = vld [vmem:[#allocation3] sm:$0xff]
      %v664 = vld [vmem:[#allocation3 + $0x8] sm:$0xff]
      %v665 = vld [vmem:[#allocation3 + $0x10] sm:$0xff]
      %v666 = vld [vmem:[#allocation3 + $0x18] sm:$0xff]
      %v667 = vld [vmem:[#allocation3 + $0x20] sm:$0xff]
      %v668 = vld [vmem:[#allocation3 + $0x28] sm:$0xff]
      %v669 = vld [vmem:[%s5] sm:$0x7]
      %v671 = vlaneseq
      %v672 = vshrl.u32 %v671, 7
      %v673 = vsub.s32 0, %v672
      %v674 = vrot.slane %v669, %v673
      %v675 = vlaneseq
      %v676 = vshrl.u32 %v675, 7
      %v677 = vsub.s32 1, %v676
      %v678 = vrot.slane %v669, %v677
      %v679 = vlaneseq
      %v680 = vshrl.u32 %v679, 7
      %v681 = vsub.s32 2, %v680
      %v682 = vrot.slane %v669, %v681
      %v686 = vadd.f32 %v663, %v674
      %v687 = vadd.f32 %v664, %v678
      %v688 = vadd.f32 %v665, %v682
      %v689 = vadd.f32 %v666, %v674
      %v690 = vadd.f32 %v667, %v678
      %v691 = vadd.f32 %v668, %v682
      %v692 = vadd.f32 %v657, %v686
      %v693 = vadd.f32 %v660, %v689
      %v694 = vmul.f32 %v692, 0.5
      %v695 = vmul.f32 %v693, 0.5
      %v696 = vtanh.pop %v694
      %v697 = vtanh.pop %v695
      %v698 = vadd.f32 %v696, 1.0
      %v699 = vadd.f32 %v697, 1.0
      %v700 = vmul.f32 %v698, 0.5
      %v701 = vmul.f32 %v699, 0.5
      %v702 = vadd.f32 %v658, %v687
      %v703 = vadd.f32 %v661, %v690
      %v704 = vmul.f32 %v702, 0.5
      %v705 = vmul.f32 %v703, 0.5
      %v706 = vtanh.pop %v704
      %v707 = vtanh.pop %v705
      %v708 = vadd.f32 %v706, 1.0
      %v709 = vadd.f32 %v707, 1.0
      %v710 = vmul.f32 %v708, 0.5
      %v711 = vmul.f32 %v709, 0.5
      %v712 = vmul.f32 %v700, %v688
      %v713 = vmul.f32 %v701, %v691
      %v714 = vadd.f32 %v659, %v712
      %v715 = vadd.f32 %v662, %v713
      %v716 = vtanh.pop %v714
      %v717 = vtanh.pop %v715
      %v718 = vld [vmem:[#allocation7] sm:$0xff]
      %v719 = vld [vmem:[#allocation7 + $0x8] sm:$0xff]
      %v720 = vsub.f32 %v718, %v716
      %v721 = vsub.f32 %v719, %v717
      %v722 = vmul.f32 %v710, %v720
      %v723 = vmul.f32 %v711, %v721
      %v724 = vadd.f32 %v716, %v722
      %v725 = vadd.f32 %v717, %v723
      %726 = vst [vmem:[#allocation12] sm:$0xff] %v724
      %727 = vst [vmem:[#allocation12 + $0x8] sm:$0xff] %v725
    $region49: #{tpu_custom_call.1} parent=1 // pred_fallthru
      _
    // Predicated region
    $region50: #{tpu_custom_call.1} parent=1 // pred_check
      _
    $region51: #{tpu_custom_call.1} parent=1 // pred_check_branch
      %729 = sbr.rel (0) target = $region53
    $region52: #{tpu_custom_call.1} parent=1 // pred_region
      %s731 = ssub.s32 256, 256
      %732 = vsyncadd [#allocation6], %s731
      %s733 = sshll.u32 [#allocation12], 4
      %s734 = int_to_ptr.vmem [resolvable:$true] %s733
      %739 = dma.vmem_to_hbm [thread:$0]  %s734, 256, %s6, [#allocation6], 128, 128, 8
    $region53: #{tpu_custom_call.1} parent=1 // pred_fallthru
      _
    // Predicated region
    $region54: #{tpu_custom_call.1} parent=1 // pred_check
      _
    $region55: #{tpu_custom_call.1} parent=1 // pred_check_branch
      %741 = sbr.rel (0) target = $region57
    $region56: #{tpu_custom_call.1} parent=1 // pred_region
      %742 = dma.done [#allocation6], 256
    $region57: #{tpu_custom_call.1} parent=1 // pred_fallthru
      _
    %743 = vsyncpa [#allocation5], 1
    %744 = vsyncpa [#allocation8], 1
    %745 = vsyncpa [#allocation11], 1
    %746 = vsyncpa [#allocation6], 1

</llo_original>
